<compile_context>
chip_gen: v7x
topology: tpu7x:2x2x1
jax: 0.10.0
libtpu: 0.0.40
codegen_flags: <defaults>
</compile_context>

<pallas_src>
import functools

import jax
import jax.numpy as jnp
from jax.experimental import pallas as pl
from jax.experimental.pallas import tpu as pltpu

MIB = 1024 * 1024
LANE = 128


# ------------------------------ small helpers --------------------------------
def _round_up(x, m):
    return ((x + m - 1) // m) * m


def _pad2(x, rows, cols):
    return jnp.pad(x, ((0, rows - x.shape[0]), (0, cols - x.shape[1])))


def _tile_candidates(n_pad):
    """Valid tiles: multiples of 128 that divide n_pad (plus n_pad itself)."""
    cands = [d for d in range(LANE, n_pad + 1, LANE) if n_pad % d == 0]
    return sorted(set(cands + [n_pad]))


def _pick_tile(n_pad, pref):
    cands = _tile_candidates(n_pad)
    ok = [c for c in cands if c <= pref]
    return ok[-1] if ok else cands[0]


def _next_smaller(n_pad, t):
    cands = [c for c in _tile_candidates(n_pad) if c < t]
    return cands[-1] if cands else t


# ------------------- Stage 1: XW_scaled = dinv ⊙ (X @ W) ----------------------
def _xw_kernel(x_ref, w_ref, dinv_ref, o_ref):
    xw = jnp.dot(x_ref[...], w_ref[...], preferred_element_type=jnp.float32)
    o_ref[...] = (xw * dinv_ref[...]).astype(o_ref.dtype)


def _xw_vmem_bytes(tm1, fin_pad, fout_pad):
    return (tm1 * fin_pad * 2 * 2          # x tile, double-buffered
            + fin_pad * fout_pad * 2 * 2   # W (constant index; counted x2 to be safe)
            + tm1 * 4 * 2                  # dinv tile
            + tm1 * fout_pad * 2 * 2)      # out tile


def compute_xw_scaled(x, w, dinv, *, tm1):
    """x:[N_pad,Fin_pad] bf16, w:[Fin_pad,Fout_pad] bf16, dinv:[N_pad,1] f32."""
    n_pad, fin_pad = x.shape
    fout_pad = w.shape[1]
    est = _xw_vmem_bytes(tm1, fin_pad, fout_pad)
    vmem_limit = int(min(64 * MIB, max(32 * MIB, est + est // 4)))
    return pl.pallas_call(
        _xw_kernel,
        out_shape=jax.ShapeDtypeStruct((n_pad, fout_pad), jnp.bfloat16),
        grid=(n_pad // tm1,),
        in_specs=[
            pl.BlockSpec((tm1, fin_pad), lambda i: (i, 0)),
            pl.BlockSpec((fin_pad, fout_pad), lambda i: (0, 0)),  # W resident
            pl.BlockSpec((tm1, 1), lambda i: (i, 0)),             # dinv rows
        ],
        out_specs=pl.BlockSpec((tm1, fout_pad), lambda i: (i, 0)),
        compiler_params=pltpu.CompilerParams(
            dimension_semantics=("parallel",),
            vmem_limit_bytes=vmem_limit,
        ),
    )(x, w, dinv)


# -------- Stage 2: out = dinv ⊙ (C @ XW_scaled) + b  (ReLU optional) ----------
def _agg_kernel(a_ref, xw_ref, dinv_ref, b_ref, o_ref, acc_ref, *,
                apply_relu, xw_resident, tk):
    k = pl.program_id(1)

    @pl.when(k == 0)
    def _init():
        acc_ref[...] = jnp.zeros_like(acc_ref)

    a_tile = a_ref[...].astype(jnp.bfloat16)        # int8 counts -> bf16 after DMA
    if xw_resident:
        start = pl.multiple_of(k * tk, LANE)
        xw_blk = xw_ref[pl.ds(start, tk), :]        # slice the VMEM-resident XW
    else:
        xw_blk = xw_ref[...]
    acc_ref[...] += jnp.dot(a_tile, xw_blk, preferred_element_type=jnp.float32)

    @pl.when(k == pl.num_programs(1) - 1)
    def _finalize():
        out = acc_ref[...] * dinv_ref[...] + b_ref[...]
        if apply_relu:
            out = jnp.maximum(out, 0.0)
        o_ref[...] = out.astype(o_ref.dtype)


def _agg_vmem_bytes(n_pad, fout_pad, tm, tk, xw_resident, out_bytes):
    a = tm * tk * 1 * 2                                            # int8 A tile x2
    xw = (n_pad * fout_pad * 2 * 2) if xw_resident else (tk * fout_pad * 2 * 2)
    dinv = tm * 4 * 2
    b = fout_pad * 4 * 2
    out = tm * fout_pad * out_bytes * 2
    acc = tm * fout_pad * 4
    return a + xw + dinv + b + out + acc


def aggregate(counts_i8, xw, dinv, b, *, apply_relu, out_dtype, tm, tk, xw_resident):
    """counts_i8:[N_pad,N_pad] int8, xw:[N_pad,Fout_pad] bf16,
    dinv:[N_pad,1] f32, b:[1,Fout_pad] f32."""
    n_pad = counts_i8.shape[0]
    fout_pad = xw.shape[1]
    out_bytes = jnp.dtype(out_dtype).itemsize
    est = _agg_vmem_bytes(n_pad, fout_pad, tm, tk, xw_resident, out_bytes)
    vmem_limit = int(min(64 * MIB, max(32 * MIB, est + est // 4)))

    if xw_resident:
        xw_spec = pl.BlockSpec((n_pad, fout_pad), lambda i, k: (0, 0))   # resident
    else:
        xw_spec = pl.BlockSpec((tk, fout_pad), lambda i, k: (k, 0))      # streamed

    kernel = functools.partial(_agg_kernel, apply_relu=apply_relu,
                               xw_resident=xw_resident, tk=tk)
    return pl.pallas_call(
        kernel,
        out_shape=jax.ShapeDtypeStruct((n_pad, fout_pad), out_dtype),
        grid=(n_pad // tm, n_pad // tk),
        in_specs=[
            pl.BlockSpec((tm, tk), lambda i, k: (i, k)),        # int8 counts tile
            xw_spec,
            pl.BlockSpec((tm, 1), lambda i, k: (i, 0)),         # dinv rows
            pl.BlockSpec((1, fout_pad), lambda i, k: (0, 0)),   # bias
        ],
        out_specs=pl.BlockSpec((tm, fout_pad), lambda i, k: (i, 0)),
        scratch_shapes=[pltpu.VMEM((tm, fout_pad), jnp.float32)],
        compiler_params=pltpu.CompilerParams(
            dimension_semantics=("parallel", "arbitrary"),
            vmem_limit_bytes=vmem_limit,
        ),
    )(counts_i8, xw, dinv, b)


# -------------- small-graph fast path: whole model in one call ----------------
def _fused_kernel(n_layers, x_ref, a_ref, dinv_ref, *rest):
    *wb_refs, o_ref = rest
    a = a_ref[...].astype(jnp.bfloat16)     # int8 counts -> bf16 once (hoisted)
    dinv = dinv_ref[...]                    # [N_pad, 1] f32
    h = x_ref[...]                          # bf16
    for li in range(n_layers):
        w = wb_refs[2 * li][...]            # bf16
        b = wb_refs[2 * li + 1][...]        # f32 [1, Fout_pad]
        xw = jnp.dot(h, w, preferred_element_type=jnp.float32) * dinv
        agg = jnp.dot(a, xw.astype(jnp.bfloat16), preferred_element_type=jnp.float32)
        out = agg * dinv + b
        if li < n_layers - 1:
            h = jnp.maximum(out, 0.0).astype(jnp.bfloat16)
        else:
            h = out
    o_ref[...] = h.astype(o_ref.dtype)


def _fused_vmem_bytes(n_pad, fin_pad, dims_pad):
    maxf = max([fin_pad] + [fo for _, fo in dims_pad])
    wbytes = sum(fi * fo * 2 + fo * 4 for fi, fo in dims_pad)
    return (n_pad * n_pad * (1 + 2)         # int8 counts + hoisted bf16 copy
            + n_pad * fin_pad * 2           # x
            + wbytes
            + n_pad * maxf * 4 * 4          # live f32 temporaries (rough)
            + n_pad * maxf * 4)


def gcn_fused_small(x_pad, counts_i8, dinv_pad, padded_params, out_dtype, vmem_limit):
    n_pad = x_pad.shape[0]
    fout_last = padded_params[-1][0].shape[1]
    flat = []
    for w, b in padded_params:
        flat += [w, b]
    kernel = functools.partial(_fused_kernel, len(padded_params))
    return pl.pallas_call(
        kernel,
        out_shape=jax.ShapeDtypeStruct((n_pad, fout_last), out_dtype),
        compiler_params=pltpu.CompilerParams(vmem_limit_bytes=vmem_limit),
    )(x_pad, counts_i8, dinv_pad, *flat)


# ------------------------------ plain-JAX glue --------------------------------
def build_graph_operands(edge_index, num_nodes):
    """C = A + remaining self-loops (integer counts, duplicates summed) and
    dinv = D^{-1/2}, matching PyG gcn_norm: A_hat = dinv ⊙ C ⊙ dinv."""
    src, dst = edge_index[0], edge_index[1]
    c = jnp.zeros((num_nodes, num_nodes), jnp.float32)
    c = c.at[dst, src].add(1.0)                              # sum duplicates
    diag = jnp.diagonal(c)
    c = c + jnp.diag(jnp.where(diag > 0.0, 0.0, 1.0))        # add missing self-loops
    deg = c.sum(axis=1)
    dinv = jnp.where(deg > 0.0, 1.0 / jnp.sqrt(deg), 0.0)
    return c, dinv


def init_gcn_params(key, in_dim, hid_dim, out_dim, n_layers):
    """Glorot-uniform weights, zero bias (PyG GCNConv defaults)."""
    dims = [(in_dim, hid_dim)]
    if n_layers > 1:
        for _ in range(n_layers - 2):
            dims.append((hid_dim, hid_dim))
        dims.append((hid_dim, out_dim))
    params = []
    for fi, fo in dims:
        key, sub = jax.random.split(key)
        limit = jnp.sqrt(6.0 / (fi + fo))
        w = jax.random.uniform(sub, (fi, fo), jnp.float32, -limit, limit)
        b = jnp.zeros((1, fo), jnp.float32)
        params.append((w, b))
    return params


def gcn_forward(params, x, edge_index, n_layers, *,
                tm_pref=512, tk_pref=2048, xw_tm_pref=2048,
                fuse_max_n=1024, xw_resident_limit_bytes=24 * MIB,
                force_streamed_xw=False):
    """Mirrors GCN.forward: ReLU after every layer except the last."""
    n = x.shape[0]
    out_dim = params[-1][0].shape[1]

    counts, dinv = build_graph_operands(edge_index, n)
    n_pad = _round_up(n, LANE)

    counts_i8 = _pad2(counts, n_pad, n_pad).astype(jnp.int8)   # exact small ints
    dinv_pad = _pad2(dinv[:, None], n_pad, 1).astype(jnp.float32)
    fin0_pad = _round_up(x.shape[1], LANE)
    h = _pad2(x, n_pad, fin0_pad).astype(jnp.bfloat16)

    padded = []
    for (w, b) in params:
        fi, fo = w.shape
        fip, fop = _round_up(fi, LANE), _round_up(fo, LANE)
        padded.append((_pad2(w, fip, fop).astype(jnp.bfloat16),
                       _pad2(b, 1, fop).astype(jnp.float32)))
    dims_pad = [(w.shape[0], w.shape[1]) for (w, _b) in padded]

    # ---- small-graph fast path: everything resident in VMEM, one call ----
    if n_pad <= fuse_max_n:
        est = _fused_vmem_bytes(n_pad, fin0_pad, dims_pad)
        if est <= 40 * MIB:
            vmem_limit = int(min(64 * MIB, max(32 * MIB, est + est // 4)))
            out = gcn_fused_small(h, counts_i8, dinv_pad, padded,
                                  jnp.float32, vmem_limit)
            return out[:n, :out_dim]

    # ---- general tiled two-stage path ----
    smallest = _tile_candidates(n_pad)[0]
    # keep >=2 row tiles when possible so v7x megacore actually splits rows
    tm_cap = min(tm_pref, n_pad // 2) if n_pad >= 2 * LANE else n_pad
    tm0 = _pick_tile(n_pad, tm_cap)
    tk0 = _pick_tile(n_pad, tk_pref)

    for li, (w_pad, b_pad) in enumerate(padded):
        last = li == len(padded) - 1
        fin_pad, fout_pad = w_pad.shape
        assert h.shape[1] == fin_pad, (h.shape, fin_pad)

        # stage-1 row tile: big (stage is step-overhead bound), budget-capped
        tm1 = _pick_tile(n_pad, min(xw_tm_pref, n_pad))
        while _xw_vmem_bytes(tm1, fin_pad, fout_pad) > 28 * MIB and tm1 > smallest:
            tm1 = _next_smaller(n_pad, tm1)

        xw = compute_xw_scaled(h, w_pad, dinv_pad, tm1=tm1)    # bf16 [N_pad,Fout_pad]

        # keep XW VMEM-resident across the reduction loop when it fits
        xw_resident = (not force_streamed_xw) and (
            n_pad * fout_pad * 2 * 2 <= xw_resident_limit_bytes)

        # shrink tiles until aggregation working set fits ~44 MiB (v7x-safe)
        out_bytes = 4 if last else 2
        tm_l, tk_l = tm0, tk0
        while _agg_vmem_bytes(n_pad, fout_pad, tm_l, tk_l,
                              xw_resident, out_bytes) > 44 * MIB:
            if tk_l > smallest:
                tk_l = _next_smaller(n_pad, tk_l)
            elif tm_l > smallest:
                tm_l = _next_smaller(n_pad, tm_l)
            elif xw_resident:
                xw_resident = False
            else:
                break

        h = aggregate(counts_i8, xw, dinv_pad, b_pad,
                      apply_relu=not last,
                      out_dtype=jnp.float32 if last else jnp.bfloat16,
                      tm=tm_l, tk=tk_l, xw_resident=xw_resident)

    return h[:n, :out_dim]


def gcn_reference(params, x, edge_index, n_layers):
    """Pure-JAX f32 reference (same math, no Pallas)."""
    counts, dinv = build_graph_operands(edge_index, x.shape[0])
    a_hat = dinv[:, None] * counts * dinv[None, :]
    h = x
    for i, (w, b) in enumerate(params):
        h = a_hat @ (h @ w) + b
        if i < len(params) - 1:
            h = jnp.maximum(h, 0.0)
    return h


def make_graph(key, n, extra_edges):
    """Deterministic ring (both directions) + a few random edges: [2, E]."""
    ring_src = jnp.arange(n, dtype=jnp.int32)
    ring_dst = (ring_src + 1) % n
    extra = jax.random.randint(key, (2, extra_edges), 0, n, dtype=jnp.int32)
    src = jnp.concatenate([ring_src, ring_dst, extra[0]])
    dst = jnp.concatenate([ring_dst, ring_src, extra[1]])
    return jnp.stack([src, dst], axis=0)


def _check(out, ref, shape, tag):
    assert out.shape == shape, (tag, out.shape, shape)
    assert jnp.all(jnp.isfinite(out)), tag
    ok = jnp.allclose(out, ref, rtol=1e-1, atol=1e-1)
    assert ok, (tag, float(jnp.max(jnp.abs(out - ref))))


# ----------------------------------- main -------------------------------------
if __name__ == "__main__":
    key = jax.random.PRNGKey(0)
    k_x1, k_e1, k_p1, k_x2, k_e2, k_p2 = jax.random.split(key, 6)

    # --- test 1: tiny graph -> fused single-call fast path ---
    n1, in1, hid1, out1, layers1 = 8, 16, 32, 8, 3
    x1 = jax.random.normal(k_x1, (n1, in1), jnp.float32)
    ei1 = make_graph(k_e1, n1, 6)
    p1 = init_gcn_params(k_p1, in1, hid1, out1, layers1)
    o1 = jax.block_until_ready(gcn_forward(p1, x1, ei1, layers1))
    _check(o1, gcn_reference(p1, x1, ei1, layers1), (n1, out1), "fused")

    # --- test 2: medium graph -> tiled path, multi-tile rows AND k-blocks,
    #             XW VMEM-resident ---
    n2, in2, hid2, out2, layers2 = 500, 96, 160, 24, 3   # N_pad=512, 4x4 grid
    x2 = jax.random.normal(k_x2, (n2, in2), jnp.float32)
    ei2 = make_graph(k_e2, n2, 40)
    p2 = init_gcn_params(k_p2, in2, hid2, out2, layers2)
    ref2 = gcn_reference(p2, x2, ei2, layers2)

    o2 = jax.block_until_ready(
        gcn_forward(p2, x2, ei2, layers2, tm_pref=128, tk_pref=128, fuse_max_n=0))
    _check(o2, ref2, (n2, out2), "tiled_resident")

    # --- test 3: same graph, streamed-XW fallback path ---
    o3 = jax.block_until_ready(
        gcn_forward(p2, x2, ei2, layers2, tm_pref=128, tk_pref=128, fuse_max_n=0,
                    force_streamed_xw=True))
    _check(o3, ref2, (n2, out2), "tiled_streamed")

    print("KERNEL_OK")
</pallas_src>

<mosaic_0001>
module attributes {stable_mosaic.version = 11 : i64} {
  func.func @_fused_kernel(%arg0: memref<128x128xbf16, #tpu.memory_space<vmem>>, %arg1: memref<128x128xi8, #tpu.memory_space<vmem>>, %arg2: memref<128x1xf32, #tpu.memory_space<vmem>>, %arg3: memref<128x128xbf16, #tpu.memory_space<vmem>>, %arg4: memref<1x128xf32, #tpu.memory_space<vmem>>, %arg5: memref<128x128xbf16, #tpu.memory_space<vmem>>, %arg6: memref<1x128xf32, #tpu.memory_space<vmem>>, %arg7: memref<128x128xbf16, #tpu.memory_space<vmem>>, %arg8: memref<1x128xf32, #tpu.memory_space<vmem>>, %arg9: memref<128x128xf32, #tpu.memory_space<vmem>>) attributes {dimension_semantics = [], scalar_prefetch = 0 : i64, scratch_operands = 0 : i64, tpu.core_type = #tpu.core_type<tc>} {
    %c0 = arith.constant 0 : index
    %c0_0 = arith.constant 0 : index
    %0 = vector.load %arg1[%c0, %c0_0] : memref<128x128xi8, #tpu.memory_space<vmem>>, vector<128x128xi8>
    %1 = arith.sitofp %0 : vector<128x128xi8> to vector<128x128xbf16>
    %c0_1 = arith.constant 0 : index
    %c0_2 = arith.constant 0 : index
    %2 = vector.load %arg2[%c0_1, %c0_2] : memref<128x1xf32, #tpu.memory_space<vmem>>, vector<128x1xf32>
    %c0_3 = arith.constant 0 : index
    %c0_4 = arith.constant 0 : index
    %3 = vector.load %arg0[%c0_3, %c0_4] : memref<128x128xbf16, #tpu.memory_space<vmem>>, vector<128x128xbf16>
    %c0_5 = arith.constant 0 : index
    %c0_6 = arith.constant 0 : index
    %4 = vector.load %arg3[%c0_5, %c0_6] : memref<128x128xbf16, #tpu.memory_space<vmem>>, vector<128x128xbf16>
    %c0_7 = arith.constant 0 : index
    %c0_8 = arith.constant 0 : index
    %5 = vector.load %arg4[%c0_7, %c0_8] : memref<1x128xf32, #tpu.memory_space<vmem>>, vector<1x128xf32>
    %cst = arith.constant dense<0.000000e+00> : vector<128x128xf32>
    %6 = tpu.matmul %3, %4, %cst {dimension_numbers = #tpu.dot_dimension_numbers<[1], [0], [0], [1], [0, 0, 1, 1], [], []>} : vector<128x128xbf16>, vector<128x128xbf16>, vector<128x128xf32> -> vector<128x128xf32>
    %7 = vector.broadcast %2 : vector<128x1xf32> to vector<128x128xf32>
    %8 = arith.mulf %6, %7 : vector<128x128xf32>
    %9 = arith.truncf %8 : vector<128x128xf32> to vector<128x128xbf16>
    %cst_9 = arith.constant dense<0.000000e+00> : vector<128x128xf32>
    %10 = tpu.matmul %1, %9, %cst_9 {dimension_numbers = #tpu.dot_dimension_numbers<[1], [0], [0], [1], [0, 0, 1, 1], [], []>} : vector<128x128xbf16>, vector<128x128xbf16>, vector<128x128xf32> -> vector<128x128xf32>
    %11 = vector.broadcast %2 : vector<128x1xf32> to vector<128x128xf32>
    %12 = arith.mulf %10, %11 : vector<128x128xf32>
    %13 = vector.broadcast %5 : vector<1x128xf32> to vector<128x128xf32>
    %14 = arith.addf %12, %13 : vector<128x128xf32>
    %cst_10 = arith.constant 0.000000e+00 : f32
    %15 = vector.broadcast %cst_10 : f32 to vector<128x128xf32>
    %16 = arith.maximumf %14, %15 : vector<128x128xf32>
    %17 = arith.truncf %16 : vector<128x128xf32> to vector<128x128xbf16>
    %c0_11 = arith.constant 0 : index
    %c0_12 = arith.constant 0 : index
    %18 = vector.load %arg5[%c0_11, %c0_12] : memref<128x128xbf16, #tpu.memory_space<vmem>>, vector<128x128xbf16>
    %c0_13 = arith.constant 0 : index
    %c0_14 = arith.constant 0 : index
    %19 = vector.load %arg6[%c0_13, %c0_14] : memref<1x128xf32, #tpu.memory_space<vmem>>, vector<1x128xf32>
    %cst_15 = arith.constant dense<0.000000e+00> : vector<128x128xf32>
    %20 = tpu.matmul %17, %18, %cst_15 {dimension_numbers = #tpu.dot_dimension_numbers<[1], [0], [0], [1], [0, 0, 1, 1], [], []>} : vector<128x128xbf16>, vector<128x128xbf16>, vector<128x128xf32> -> vector<128x128xf32>
    %21 = vector.broadcast %2 : vector<128x1xf32> to vector<128x128xf32>
    %22 = arith.mulf %20, %21 : vector<128x128xf32>
    %23 = arith.truncf %22 : vector<128x128xf32> to vector<128x128xbf16>
    %cst_16 = arith.constant dense<0.000000e+00> : vector<128x128xf32>
    %24 = tpu.matmul %1, %23, %cst_16 {dimension_numbers = #tpu.dot_dimension_numbers<[1], [0], [0], [1], [0, 0, 1, 1], [], []>} : vector<128x128xbf16>, vector<128x128xbf16>, vector<128x128xf32> -> vector<128x128xf32>
    %25 = vector.broadcast %2 : vector<128x1xf32> to vector<128x128xf32>
    %26 = arith.mulf %24, %25 : vector<128x128xf32>
    %27 = vector.broadcast %19 : vector<1x128xf32> to vector<128x128xf32>
    %28 = arith.addf %26, %27 : vector<128x128xf32>
    %cst_17 = arith.constant 0.000000e+00 : f32
    %29 = vector.broadcast %cst_17 : f32 to vector<128x128xf32>
    %30 = arith.maximumf %28, %29 : vector<128x128xf32>
    %31 = arith.truncf %30 : vector<128x128xf32> to vector<128x128xbf16>
    %c0_18 = arith.constant 0 : index
    %c0_19 = arith.constant 0 : index
    %32 = vector.load %arg7[%c0_18, %c0_19] : memref<128x128xbf16, #tpu.memory_space<vmem>>, vector<128x128xbf16>
    %c0_20 = arith.constant 0 : index
    %c0_21 = arith.constant 0 : index
    %33 = vector.load %arg8[%c0_20, %c0_21] : memref<1x128xf32, #tpu.memory_space<vmem>>, vector<1x128xf32>
    %cst_22 = arith.constant dense<0.000000e+00> : vector<128x128xf32>
    %34 = tpu.matmul %31, %32, %cst_22 {dimension_numbers = #tpu.dot_dimension_numbers<[1], [0], [0], [1], [0, 0, 1, 1], [], []>} : vector<128x128xbf16>, vector<128x128xbf16>, vector<128x128xf32> -> vector<128x128xf32>
    %35 = vector.broadcast %2 : vector<128x1xf32> to vector<128x128xf32>
    %36 = arith.mulf %34, %35 : vector<128x128xf32>
    %37 = arith.truncf %36 : vector<128x128xf32> to vector<128x128xbf16>
    %cst_23 = arith.constant dense<0.000000e+00> : vector<128x128xf32>
    %38 = tpu.matmul %1, %37, %cst_23 {dimension_numbers = #tpu.dot_dimension_numbers<[1], [0], [0], [1], [0, 0, 1, 1], [], []>} : vector<128x128xbf16>, vector<128x128xbf16>, vector<128x128xf32> -> vector<128x128xf32>
    %39 = vector.broadcast %2 : vector<128x1xf32> to vector<128x128xf32>
    %40 = arith.mulf %38, %39 : vector<128x128xf32>
    %41 = vector.broadcast %33 : vector<1x128xf32> to vector<128x128xf32>
    %42 = arith.addf %40, %41 : vector<128x128xf32>
    %c0_24 = arith.constant 0 : index
    %c0_25 = arith.constant 0 : index
    %43 = vector.load %arg9[%c0_24, %c0_25] : memref<128x128xf32, #tpu.memory_space<vmem>>, vector<128x128xf32>
    tpu.vector_store %arg9[%c0_24, %c0_25], %42 {strides = array<i32>} : memref<128x128xf32, #tpu.memory_space<vmem>>, vector<128x128xf32>,
    return
  }
}

</mosaic_0001>

<llo_original>
// kernel: tpu_custom_call.1
$region0: #{tpu_custom_call.1}
  #allocation0 [shape = 'u32[]', space=smem, size = 0x4, offset = 0x4, fixed_abs, tag = 'smem constant byte address 0x4 - core index']
  #allocation1 [shape = 'u32[144,128]{1,0:T(1,128)}', space=vmem, size = 0x12000, scoped, tag = 'internal scratch']
  %s0 = inlined_call_operand.vmem [shape: bf16[128,128], index: 0, kind: input, shape index: {}]
  %s1 = inlined_call_operand.hbm [shape: s8[128,128], index: 1, kind: input, shape index: {}]
  %s2 = inlined_call_operand.vmem [shape: f32[128,1], index: 2, kind: input, shape index: {}]
  %s3 = inlined_call_operand.vmem [shape: bf16[128,128], index: 3, kind: input, shape index: {}]
  %s4 = inlined_call_operand.vmem [shape: f32[1,128], index: 4, kind: input, shape index: {}]
  %s5 = inlined_call_operand.hbm [shape: bf16[128,128], index: 5, kind: input, shape index: {}]
  %s6 = inlined_call_operand.vmem [shape: f32[1,128], index: 6, kind: input, shape index: {}]
  %s7 = inlined_call_operand.hbm [shape: bf16[128,128], index: 7, kind: input, shape index: {}]
  %s8 = inlined_call_operand.vmem [shape: f32[1,128], index: 8, kind: input, shape index: {}]
  %s9 = inlined_call_operand.hbm [shape: f32[128,128], index: 9, kind: output, shape index: {}]
  %s10 = sld [smem:[#allocation0]]
  $region58: #{tpu_custom_call.1} parent=0
    _
  %s12 = ssub.s32 1, %s10
  %s13 = scalar_select 0, %s12, %s10
  $region1: #{tpu_custom_call.1} parent=0
    #allocation2 [shape = 'u8[16384]{0}', space=vmem, size = 0x4000, scoped, tag = 'input window, operand 1, single buffered']
    #allocation3 [shape = 's32[1]{0}', space=sflag, size = 0x4, scoped, tag = 'scoped memory for tpu_custom_call.1']
    #allocation4 [shape = 's32[1]{0}', space=sflag, size = 0x4, scoped, tag = 'scoped memory for tpu_custom_call.1']
    #allocation5 [shape = 'u8[32768]{0}', space=vmem, size = 0x8000, scoped, tag = 'input window, operand 5, single buffered']
    #allocation6 [shape = 's32[1]{0}', space=sflag, size = 0x4, scoped, tag = 'scoped memory for tpu_custom_call.1']
    #allocation7 [shape = 'u8[32768]{0}', space=vmem, size = 0x8000, scoped, tag = 'input window, operand 7, single buffered']
    #allocation8 [shape = 'u8[65536]{0}', space=vmem, size = 0x10000, scoped, tag = 'output window, operand 0, single buffered']
    %14 = vsyncpa [#allocation3], 0
    %15 = vsyncpa [#allocation6], 0
    %16 = vsyncpa [#allocation4], 0
    // Predicated region
    $region2: #{tpu_custom_call.1} parent=1 // pred_check
      _
    $region3: #{tpu_custom_call.1} parent=1 // pred_check_branch
      %18 = sbr.rel (0) target = $region5
    $region4: #{tpu_custom_call.1} parent=1 // pred_region
      _
    $region5: #{tpu_custom_call.1} parent=1 // pred_fallthru
      _
    // Predicated region
    $region6: #{tpu_custom_call.1} parent=1 // pred_check
      _
    $region7: #{tpu_custom_call.1} parent=1 // pred_check_branch
      %20 = sbr.rel (0) target = $region9
    $region8: #{tpu_custom_call.1} parent=1 // pred_region
      %s22 = ssub.s32 512, 512
      %23 = vsyncadd [#allocation3], %s22
      %s24 = sshll.u32 [#allocation2], 4
      %s25 = int_to_ptr.vmem [resolvable:$true] %s24
      %30 = dma.hbm_to_vmem [thread:$0]  %s1, 512, %s25, [#allocation3], 128, 128, 8
    $region9: #{tpu_custom_call.1} parent=1 // pred_fallthru
      _
    // Predicated region
    $region10: #{tpu_custom_call.1} parent=1 // pred_check
      _
    $region11: #{tpu_custom_call.1} parent=1 // pred_check_branch
      %32 = sbr.rel (0) target = $region13
    $region12: #{tpu_custom_call.1} parent=1 // pred_region
      _
    $region13: #{tpu_custom_call.1} parent=1 // pred_fallthru
      _
    // Predicated region
    $region14: #{tpu_custom_call.1} parent=1 // pred_check
      _
    $region15: #{tpu_custom_call.1} parent=1 // pred_check_branch
      %34 = sbr.rel (0) target = $region17
    $region16: #{tpu_custom_call.1} parent=1 // pred_region
      _
    $region17: #{tpu_custom_call.1} parent=1 // pred_fallthru
      _
    // Predicated region
    $region18: #{tpu_custom_call.1} parent=1 // pred_check
      _
    $region19: #{tpu_custom_call.1} parent=1 // pred_check_branch
      %36 = sbr.rel (0) target = $region21
    $region20: #{tpu_custom_call.1} parent=1 // pred_region
      _
    $region21: #{tpu_custom_call.1} parent=1 // pred_fallthru
      _
    // Predicated region
    $region22: #{tpu_custom_call.1} parent=1 // pred_check
      _
    $region23: #{tpu_custom_call.1} parent=1 // pred_check_branch
      %38 = sbr.rel (0) target = $region25
    $region24: #{tpu_custom_call.1} parent=1 // pred_region
      %s40 = ssub.s32 1024, 1024
      %41 = vsyncadd [#allocation6], %s40
      %s42 = sshll.u32 [#allocation5], 4
      %s43 = int_to_ptr.vmem [resolvable:$true] %s42
      %48 = dma.hbm_to_vmem [thread:$0]  %s5, 1024, %s43, [#allocation6], 64, 64, 4
    $region25: #{tpu_custom_call.1} parent=1 // pred_fallthru
      _
    // Predicated region
    $region26: #{tpu_custom_call.1} parent=1 // pred_check
      _
    $region27: #{tpu_custom_call.1} parent=1 // pred_check_branch
      %50 = sbr.rel (0) target = $region29
    $region28: #{tpu_custom_call.1} parent=1 // pred_region
      _
    $region29: #{tpu_custom_call.1} parent=1 // pred_fallthru
      _
    // Predicated region
    $region30: #{tpu_custom_call.1} parent=1 // pred_check
      _
    $region31: #{tpu_custom_call.1} parent=1 // pred_check_branch
      %52 = sbr.rel (0) target = $region33
    $region32: #{tpu_custom_call.1} parent=1 // pred_region
      %s54 = ssub.s32 1024, 1024
      %55 = vsyncadd [#allocation6], %s54
      %s56 = sshll.u32 [#allocation7], 4
      %s57 = int_to_ptr.vmem [resolvable:$true] %s56
      %62 = dma.hbm_to_vmem [thread:$0]  %s7, 1024, %s57, [#allocation6], 64, 64, 4
    $region33: #{tpu_custom_call.1} parent=1 // pred_fallthru
      _
    // Predicated region
    $region34: #{tpu_custom_call.1} parent=1 // pred_check
      _
    $region35: #{tpu_custom_call.1} parent=1 // pred_check_branch
      %64 = sbr.rel (0) target = $region37
    $region36: #{tpu_custom_call.1} parent=1 // pred_region
      _
    $region37: #{tpu_custom_call.1} parent=1 // pred_fallthru
      _
    // Predicated region
    $region38: #{tpu_custom_call.1} parent=1 // pred_check
      _
    $region39: #{tpu_custom_call.1} parent=1 // pred_check_branch
      %66 = sbr.rel (0) target = $region41
    $region40: #{tpu_custom_call.1} parent=1 // pred_region
      %67 = dma.done [#allocation3], 512
    $region41: #{tpu_custom_call.1} parent=1 // pred_fallthru
      _
    // Predicated region
    $region42: #{tpu_custom_call.1} parent=1 // pred_check
      _
    $region43: #{tpu_custom_call.1} parent=1 // pred_check_branch
      %69 = sbr.rel (0) target = $region45
    $region44: #{tpu_custom_call.1} parent=1 // pred_region
      %70 = dma.done [#allocation6], 1024
    $region45: #{tpu_custom_call.1} parent=1 // pred_fallthru
      _
    // Predicated region
    $region46: #{tpu_custom_call.1} parent=1 // pred_check
      _
    $region47: #{tpu_custom_call.1} parent=1 // pred_check_branch
      %72 = sbr.rel (0) target = $region49
    $region48: #{tpu_custom_call.1} parent=1 // pred_region
      %73 = dma.done [#allocation6], 1024
    $region49: #{tpu_custom_call.1} parent=1 // pred_fallthru
      _
    %v75 = vld [vmem:[#allocation2] sm:$0xff]
    %v76 = vld [vmem:[#allocation2 + $0x8] sm:$0xff]
    %v77 = vld [vmem:[#allocation2 + $0x10] sm:$0xff]
    %v78 = vld [vmem:[#allocation2 + $0x18] sm:$0xff]
    %v79 = vunpack.c.l.s8.bf16 %v75
    %v80 = vunpack.c.h.s8.bf16 %v75
    %v81 = vunpack.c.l.s8.bf16 %v76
    %v82 = vunpack.c.h.s8.bf16 %v76
    %v83 = vunpack.c.l.s8.bf16 %v77
    %v84 = vunpack.c.h.s8.bf16 %v77
    %v85 = vunpack.c.l.s8.bf16 %v78
    %v86 = vunpack.c.h.s8.bf16 %v78
    %v87 = vld [vmem:[%s2] sm:$0xff]
    %v88 = vld [vmem:[%s2 + $0x8] sm:$0xff]
    %v89 = vld [vmem:[%s2 + $0x10] sm:$0xff]
    %v90 = vld [vmem:[%s2 + $0x18] sm:$0xff]
    %v91 = vld [vmem:[%s2 + $0x20] sm:$0xff]
    %v92 = vld [vmem:[%s2 + $0x28] sm:$0xff]
    %v93 = vld [vmem:[%s2 + $0x30] sm:$0xff]
    %v94 = vld [vmem:[%s2 + $0x38] sm:$0xff]
    %v95 = vld [vmem:[%s2 + $0x40] sm:$0xff]
    %v96 = vld [vmem:[%s2 + $0x48] sm:$0xff]
    %v97 = vld [vmem:[%s2 + $0x50] sm:$0xff]
    %v98 = vld [vmem:[%s2 + $0x58] sm:$0xff]
    %v99 = vld [vmem:[%s2 + $0x60] sm:$0xff]
    %v100 = vld [vmem:[%s2 + $0x68] sm:$0xff]
    %v101 = vld [vmem:[%s2 + $0x70] sm:$0xff]
    %v102 = vld [vmem:[%s2 + $0x78] sm:$0xff]
    %v103 = vld [vmem:[%s0] sm:$0xf]
    %v104 = vld [vmem:[%s0 + $0x4] sm:$0xf]
    %v105 = vld [vmem:[%s0 + $0x8] sm:$0xf]
    %v106 = vld [vmem:[%s0 + $0xc] sm:$0xf]
    %v107 = vld [vmem:[%s0 + $0x10] sm:$0xf]
    %v108 = vld [vmem:[%s0 + $0x14] sm:$0xf]
    %v109 = vld [vmem:[%s0 + $0x18] sm:$0xf]
    %v110 = vld [vmem:[%s0 + $0x1c] sm:$0xf]
    %v111 = vld [vmem:[%s0 + $0x20] sm:$0xf]
    %v112 = vld [vmem:[%s0 + $0x24] sm:$0xf]
    %v113 = vld [vmem:[%s0 + $0x28] sm:$0xf]
    %v114 = vld [vmem:[%s0 + $0x2c] sm:$0xf]
    %v115 = vld [vmem:[%s0 + $0x30] sm:$0xf]
    %v116 = vld [vmem:[%s0 + $0x34] sm:$0xf]
    %v117 = vld [vmem:[%s0 + $0x38] sm:$0xf]
    %v118 = vld [vmem:[%s0 + $0x3c] sm:$0xf]
    %v119 = vld [vmem:[%s3] sm:$0xf]
    %v120 = vld [vmem:[%s3 + $0x4] sm:$0xf]
    %v121 = vld [vmem:[%s3 + $0x8] sm:$0xf]
    %v122 = vld [vmem:[%s3 + $0xc] sm:$0xf]
    %v123 = vld [vmem:[%s3 + $0x10] sm:$0xf]
    %v124 = vld [vmem:[%s3 + $0x14] sm:$0xf]
    %v125 = vld [vmem:[%s3 + $0x18] sm:$0xf]
    %v126 = vld [vmem:[%s3 + $0x1c] sm:$0xf]
    %v127 = vld [vmem:[%s3 + $0x20] sm:$0xf]
    %v128 = vld [vmem:[%s3 + $0x24] sm:$0xf]
    %v129 = vld [vmem:[%s3 + $0x28] sm:$0xf]
    %v130 = vld [vmem:[%s3 + $0x2c] sm:$0xf]
    %v131 = vld [vmem:[%s3 + $0x30] sm:$0xf]
    %v132 = vld [vmem:[%s3 + $0x34] sm:$0xf]
    %v133 = vld [vmem:[%s3 + $0x38] sm:$0xf]
    %v134 = vld [vmem:[%s3 + $0x3c] sm:$0xf]
    %v135 = vld [vmem:[%s4] sm:$0x1]
    %v152 = vunpack.c.l.b16 %v103
    %v153 = vunpack.c.l.b16 %v104
    %v154 = vunpack.c.l.b16 %v105
    %v155 = vunpack.c.l.b16 %v106
    %v156 = vunpack.c.l.b16 %v107
    %v157 = vunpack.c.l.b16 %v108
    %v158 = vunpack.c.l.b16 %v109
    %v159 = vunpack.c.l.b16 %v110
    %v160 = vunpack.c.l.b16 %v111
    %v161 = vunpack.c.l.b16 %v112
    %v162 = vunpack.c.l.b16 %v113
    %v163 = vunpack.c.l.b16 %v114
    %v164 = vunpack.c.l.b16 %v115
    %v165 = vunpack.c.l.b16 %v116
    %v166 = vunpack.c.l.b16 %v117
    %v167 = vunpack.c.l.b16 %v118
    %v168 = vpack.c.b16 %v153, %v152
    %v169 = vpack.c.b16 %v155, %v154
    %v170 = vpack.c.b16 %v157, %v156
    %v171 = vpack.c.b16 %v159, %v158
    %v172 = vpack.c.b16 %v161, %v160
    %v173 = vpack.c.b16 %v163, %v162
    %v174 = vpack.c.b16 %v165, %v164
    %v175 = vpack.c.b16 %v167, %v166
    %v200 = vunpack.c.l.b16 %v119
    %v201 = vunpack.c.l.b16 %v120
    %v202 = vunpack.c.l.b16 %v121
    %v203 = vunpack.c.l.b16 %v122
    %v204 = vunpack.c.l.b16 %v123
    %v205 = vunpack.c.l.b16 %v124
    %v206 = vunpack.c.l.b16 %v125
    %v207 = vunpack.c.l.b16 %v126
    %v208 = vunpack.c.l.b16 %v127
    %v209 = vunpack.c.l.b16 %v128
    %v210 = vunpack.c.l.b16 %v129
    %v211 = vunpack.c.l.b16 %v130
    %v212 = vunpack.c.l.b16 %v131
    %v213 = vunpack.c.l.b16 %v132
    %v214 = vunpack.c.l.b16 %v133
    %v215 = vunpack.c.l.b16 %v134
    %v216 = vpack.c.b16 %v201, %v200
    %v217 = vpack.c.b16 %v203, %v202
    %v218 = vpack.c.b16 %v205, %v204
    %v219 = vpack.c.b16 %v207, %v206
    %v220 = vpack.c.b16 %v209, %v208
    %v221 = vpack.c.b16 %v211, %v210
    %v222 = vpack.c.b16 %v213, %v212
    %v223 = vpack.c.b16 %v215, %v214
    %232 = vmatprep.subr.bf16.mxu0 0
    %233 = vmatpush1.bf16.msra.mxu0 %v216
    %234 = vmatprep.subr.bf16.mxu0 0
    %235 = vmatpush1.bf16.msra.mxu0 %v217
    %236 = vmatprep.subr.bf16.mxu0 0
    %237 = vmatpush1.bf16.msra.mxu0 %v218
    %238 = vmatprep.subr.bf16.mxu0 0
    %239 = vmatpush1.bf16.msra.mxu0 %v219
    %240 = vmatprep.subr.bf16.mxu0 0
    %241 = vmatpush1.bf16.msra.mxu0 %v220
    %242 = vmatprep.subr.bf16.mxu0 0
    %243 = vmatpush1.bf16.msra.mxu0 %v221
    %244 = vmatprep.subr.bf16.mxu0 0
    %245 = vmatpush1.bf16.msra.mxu0 %v222
    %246 = vmatprep.subr.bf16.mxu0 0
    %247 = vmatpush1.bf16.msra.mxu0 %v223
    %248 = vmatprep.subr.bf16.mxu0 0
    %249 = vmatpush1.bf16.msra.mxu0 0
    %250 = vmatprep.subr.bf16.mxu0 0
    %251 = vmatpush1.bf16.msra.mxu0 0
    %252 = vmatprep.subr.bf16.mxu0 0
    %253 = vmatpush1.bf16.msra.mxu0 0
    %254 = vmatprep.subr.bf16.mxu0 0
    %255 = vmatpush1.bf16.msra.mxu0 0
    %256 = vmatprep.subr.bf16.mxu0 0
    %257 = vmatpush1.bf16.msra.mxu0 0
    %258 = vmatprep.subr.bf16.mxu0 0
    %259 = vmatpush1.bf16.msra.mxu0 0
    %260 = vmatprep.subr.bf16.mxu0 0
    %261 = vmatpush1.bf16.msra.mxu0 0
    %262 = vmatprep.subr.bf16.mxu0 0
    %263 = vmatpush1.bf16.msra.mxu0 0
    %264 = vmatprep.mubr.bf16.mxu0 0
    %265 = vmatmul.mubr.bf16.gmra.mrb[0].mxu0 %v168
    %v266 = vpop.f32.mrb[0].mxu0
    %v267 = vadd.f32 0.0, %v266
    %v268 = vpop.f32.mrb[0].mxu0
    %v269 = vpop.f32.mrb[0].mxu0
    %v270 = vadd.f32 0.0, %v269
    %v271 = vpop.f32.mrb[0].mxu0
    %272 = vmatprep.mubr.bf16.mxu0 0
    %273 = vmatmul.mubr.bf16.gmra.mrb[0].mxu0 %v169
    %v274 = vpop.f32.mrb[0].mxu0
    %v275 = vadd.f32 0.0, %v274
    %v276 = vpop.f32.mrb[0].mxu0
    %v277 = vpop.f32.mrb[0].mxu0
    %v278 = vadd.f32 0.0, %v277
    %v279 = vpop.f32.mrb[0].mxu0
    %280 = vmatprep.mubr.bf16.mxu0 0
    %281 = vmatmul.mubr.bf16.gmra.mrb[0].mxu0 %v170
    %v282 = vpop.f32.mrb[0].mxu0
    %v283 = vadd.f32 0.0, %v282
    %v284 = vpop.f32.mrb[0].mxu0
    %v285 = vpop.f32.mrb[0].mxu0
    %v286 = vadd.f32 0.0, %v285
    %v287 = vpop.f32.mrb[0].mxu0
    %288 = vmatprep.mubr.bf16.mxu0 0
    %289 = vmatmul.mubr.bf16.gmra.mrb[0].mxu0 %v171
    %v290 = vpop.f32.mrb[0].mxu0
    %v291 = vadd.f32 0.0, %v290
    %v292 = vpop.f32.mrb[0].mxu0
    %v293 = vpop.f32.mrb[0].mxu0
    %v294 = vadd.f32 0.0, %v293
    %v295 = vpop.f32.mrb[0].mxu0
    %296 = vmatprep.mubr.bf16.mxu0 0
    %297 = vmatmul.mubr.bf16.gmra.mrb[0].mxu0 %v172
    %v298 = vpop.f32.mrb[0].mxu0
    %v299 = vadd.f32 0.0, %v298
    %v300 = vpop.f32.mrb[0].mxu0
    %v301 = vpop.f32.mrb[0].mxu0
    %v302 = vadd.f32 0.0, %v301
    %v303 = vpop.f32.mrb[0].mxu0
    %304 = vmatprep.mubr.bf16.mxu0 0
    %305 = vmatmul.mubr.bf16.gmra.mrb[0].mxu0 %v173
    %v306 = vpop.f32.mrb[0].mxu0
    %v307 = vadd.f32 0.0, %v306
    %v308 = vpop.f32.mrb[0].mxu0
    %v309 = vpop.f32.mrb[0].mxu0
    %v310 = vadd.f32 0.0, %v309
    %v311 = vpop.f32.mrb[0].mxu0
    %312 = vmatprep.mubr.bf16.mxu0 0
    %313 = vmatmul.mubr.bf16.gmra.mrb[0].mxu0 %v174
    %v314 = vpop.f32.mrb[0].mxu0
    %v315 = vadd.f32 0.0, %v314
    %v316 = vpop.f32.mrb[0].mxu0
    %v317 = vpop.f32.mrb[0].mxu0
    %v318 = vadd.f32 0.0, %v317
    %v319 = vpop.f32.mrb[0].mxu0
    %320 = vmatprep.mubr.bf16.mxu0 0
    %321 = vmatmul.mubr.bf16.gmra.mrb[0].mxu0 %v175
    %v322 = vpop.f32.mrb[0].mxu0
    %v323 = vadd.f32 0.0, %v322
    %v324 = vpop.f32.mrb[0].mxu0
    %v325 = vpop.f32.mrb[0].mxu0
    %v326 = vadd.f32 0.0, %v325
    %v327 = vpop.f32.mrb[0].mxu0
    %328 = vdwg.mxu0
    %330 = vset.pattern.permute.xlu0 0
    %331 = vperm.xlu0 %330, %v87
    %v332 = vpop.permute.xlu0 %331
    %335 = vset.pattern.permute.xlu0 0
    %336 = vperm.xlu0 %335, %v88
    %v337 = vpop.permute.xlu0 %336
    %340 = vset.pattern.permute.xlu0 0
    %341 = vperm.xlu0 %340, %v89
    %v342 = vpop.permute.xlu0 %341
    %345 = vset.pattern.permute.xlu0 0
    %346 = vperm.xlu0 %345, %v90
    %v347 = vpop.permute.xlu0 %346
    %350 = vset.pattern.permute.xlu0 0
    %351 = vperm.xlu0 %350, %v91
    %v352 = vpop.permute.xlu0 %351
    %355 = vset.pattern.permute.xlu0 0
    %356 = vperm.xlu0 %355, %v92
    %v357 = vpop.permute.xlu0 %356
    %360 = vset.pattern.permute.xlu0 0
    %361 = vperm.xlu0 %360, %v93
    %v362 = vpop.permute.xlu0 %361
    %365 = vset.pattern.permute.xlu0 0
    %366 = vperm.xlu0 %365, %v94
    %v367 = vpop.permute.xlu0 %366
    %370 = vset.pattern.permute.xlu0 0
    %371 = vperm.xlu0 %370, %v95
    %v372 = vpop.permute.xlu0 %371
    %375 = vset.pattern.permute.xlu0 0
    %376 = vperm.xlu0 %375, %v96
    %v377 = vpop.permute.xlu0 %376
    %380 = vset.pattern.permute.xlu0 0
    %381 = vperm.xlu0 %380, %v97
    %v382 = vpop.permute.xlu0 %381
    %385 = vset.pattern.permute.xlu0 0
    %386 = vperm.xlu0 %385, %v98
    %v387 = vpop.permute.xlu0 %386
    %390 = vset.pattern.permute.xlu0 0
    %391 = vperm.xlu0 %390, %v99
    %v392 = vpop.permute.xlu0 %391
    %395 = vset.pattern.permute.xlu0 0
    %396 = vperm.xlu0 %395, %v100
    %v397 = vpop.permute.xlu0 %396
    %400 = vset.pattern.permute.xlu0 0
    %401 = vperm.xlu0 %400, %v101
    %v402 = vpop.permute.xlu0 %401
    %405 = vset.pattern.permute.xlu0 0
    %406 = vperm.xlu0 %405, %v102
    %v407 = vpop.permute.xlu0 %406
    %v409 = vmul.f32 %v267, %v332
    %v410 = vmul.f32 %v270, %v337
    %v411 = vmul.f32 %v275, %v342
    %v412 = vmul.f32 %v278, %v347
    %v413 = vmul.f32 %v283, %v352
    %v414 = vmul.f32 %v286, %v357
    %v415 = vmul.f32 %v291, %v362
    %v416 = vmul.f32 %v294, %v367
    %v417 = vmul.f32 %v299, %v372
    %v418 = vmul.f32 %v302, %v377
    %v419 = vmul.f32 %v307, %v382
    %v420 = vmul.f32 %v310, %v387
    %v421 = vmul.f32 %v315, %v392
    %v422 = vmul.f32 %v318, %v397
    %v423 = vmul.f32 %v323, %v402
    %v424 = vmul.f32 %v326, %v407
    %v425 = vpack.c.bf16 %v410, %v409
    %v426 = vpack.c.bf16 %v412, %v411
    %v427 = vpack.c.bf16 %v414, %v413
    %v428 = vpack.c.bf16 %v416, %v415
    %v429 = vpack.c.bf16 %v418, %v417
    %v430 = vpack.c.bf16 %v420, %v419
    %v431 = vpack.c.bf16 %v422, %v421
    %v432 = vpack.c.bf16 %v424, %v423
    %433 = vmatprep.subr.bf16.mxu0 0
    %434 = vmatpush1.bf16.msra.mxu0 %v425
    %435 = vmatprep.subr.bf16.mxu0 0
    %436 = vmatpush1.bf16.msra.mxu0 %v426
    %437 = vmatprep.subr.bf16.mxu0 0
    %438 = vmatpush1.bf16.msra.mxu0 %v427
    %439 = vmatprep.subr.bf16.mxu0 0
    %440 = vmatpush1.bf16.msra.mxu0 %v428
    %441 = vmatprep.subr.bf16.mxu0 0
    %442 = vmatpush1.bf16.msra.mxu0 %v429
    %443 = vmatprep.subr.bf16.mxu0 0
    %444 = vmatpush1.bf16.msra.mxu0 %v430
    %445 = vmatprep.subr.bf16.mxu0 0
    %446 = vmatpush1.bf16.msra.mxu0 %v431
    %447 = vmatprep.subr.bf16.mxu0 0
    %448 = vmatpush1.bf16.msra.mxu0 %v432
    %449 = vmatprep.subr.bf16.mxu0 0
    %450 = vmatpush1.bf16.msra.mxu0 0
    %451 = vmatprep.subr.bf16.mxu0 0
    %452 = vmatpush1.bf16.msra.mxu0 0
    %453 = vmatprep.subr.bf16.mxu0 0
    %454 = vmatpush1.bf16.msra.mxu0 0
    %455 = vmatprep.subr.bf16.mxu0 0
    %456 = vmatpush1.bf16.msra.mxu0 0
    %457 = vmatprep.subr.bf16.mxu0 0
    %458 = vmatpush1.bf16.msra.mxu0 0
    %459 = vmatprep.subr.bf16.mxu0 0
    %460 = vmatpush1.bf16.msra.mxu0 0
    %461 = vmatprep.subr.bf16.mxu0 0
    %462 = vmatpush1.bf16.msra.mxu0 0
    %463 = vmatprep.subr.bf16.mxu0 0
    %464 = vmatpush1.bf16.msra.mxu0 0
    %465 = vmatprep.mubr.bf16.mxu0 0
    %466 = vmatmul.mubr.bf16.gmra.mrb[0].mxu0 %v79
    %v467 = vpop.f32.mrb[0].mxu0
    %v468 = vadd.f32 0.0, %v467
    %v469 = vpop.f32.mrb[0].mxu0
    %v470 = vpop.f32.mrb[0].mxu0
    %v471 = vadd.f32 0.0, %v470
    %v472 = vpop.f32.mrb[0].mxu0
    %473 = vmatprep.mubr.bf16.mxu0 0
    %474 = vmatmul.mubr.bf16.gmra.mrb[0].mxu0 %v80
    %v475 = vpop.f32.mrb[0].mxu0
    %v476 = vadd.f32 0.0, %v475
    %v477 = vpop.f32.mrb[0].mxu0
    %v478 = vpop.f32.mrb[0].mxu0
    %v479 = vadd.f32 0.0, %v478
    %v480 = vpop.f32.mrb[0].mxu0
    %481 = vmatprep.mubr.bf16.mxu0 0
    %482 = vmatmul.mubr.bf16.gmra.mrb[0].mxu0 %v81
    %v483 = vpop.f32.mrb[0].mxu0
    %v484 = vadd.f32 0.0, %v483
    %v485 = vpop.f32.mrb[0].mxu0
    %v486 = vpop.f32.mrb[0].mxu0
    %v487 = vadd.f32 0.0, %v486
    %v488 = vpop.f32.mrb[0].mxu0
    %489 = vmatprep.mubr.bf16.mxu0 0
    %490 = vmatmul.mubr.bf16.gmra.mrb[0].mxu0 %v82
    %v491 = vpop.f32.mrb[0].mxu0
    %v492 = vadd.f32 0.0, %v491
    %v493 = vpop.f32.mrb[0].mxu0
    %v494 = vpop.f32.mrb[0].mxu0
    %v495 = vadd.f32 0.0, %v494
    %v496 = vpop.f32.mrb[0].mxu0
    %497 = vmatprep.mubr.bf16.mxu0 0
    %498 = vmatmul.mubr.bf16.gmra.mrb[0].mxu0 %v83
    %v499 = vpop.f32.mrb[0].mxu0
    %v500 = vadd.f32 0.0, %v499
    %v501 = vpop.f32.mrb[0].mxu0
    %v502 = vpop.f32.mrb[0].mxu0
    %v503 = vadd.f32 0.0, %v502
    %v504 = vpop.f32.mrb[0].mxu0
    %505 = vmatprep.mubr.bf16.mxu0 0
    %506 = vmatmul.mubr.bf16.gmra.mrb[0].mxu0 %v84
    %v507 = vpop.f32.mrb[0].mxu0
    %v508 = vadd.f32 0.0, %v507
    %v509 = vpop.f32.mrb[0].mxu0
    %v510 = vpop.f32.mrb[0].mxu0
    %v511 = vadd.f32 0.0, %v510
    %v512 = vpop.f32.mrb[0].mxu0
    %513 = vmatprep.mubr.bf16.mxu0 0
    %514 = vmatmul.mubr.bf16.gmra.mrb[0].mxu0 %v85
    %v515 = vpop.f32.mrb[0].mxu0
    %v516 = vadd.f32 0.0, %v515
    %v517 = vpop.f32.mrb[0].mxu0
    %v518 = vpop.f32.mrb[0].mxu0
    %v519 = vadd.f32 0.0, %v518
    %v520 = vpop.f32.mrb[0].mxu0
    %521 = vmatprep.mubr.bf16.mxu0 0
    %522 = vmatmul.mubr.bf16.gmra.mrb[0].mxu0 %v86
    %v523 = vpop.f32.mrb[0].mxu0
    %v524 = vadd.f32 0.0, %v523
    %v525 = vpop.f32.mrb[0].mxu0
    %v526 = vpop.f32.mrb[0].mxu0
    %v527 = vadd.f32 0.0, %v526
    %v528 = vpop.f32.mrb[0].mxu0
    %529 = vdwg.mxu0
    %v530 = vmul.f32 %v468, %v332
    %v531 = vmul.f32 %v471, %v337
    %v532 = vmul.f32 %v476, %v342
    %v533 = vmul.f32 %v479, %v347
    %v534 = vmul.f32 %v484, %v352
    %v535 = vmul.f32 %v487, %v357
    %v536 = vmul.f32 %v492, %v362
    %v537 = vmul.f32 %v495, %v367
    %v538 = vmul.f32 %v500, %v372
    %v539 = vmul.f32 %v503, %v377
    %v540 = vmul.f32 %v508, %v382
    %v541 = vmul.f32 %v511, %v387
    %v542 = vmul.f32 %v516, %v392
    %v543 = vmul.f32 %v519, %v397
    %v544 = vmul.f32 %v524, %v402
    %v545 = vmul.f32 %v527, %v407
    %v547 = vlaneseq
    %v548 = vshrl.u32 %v547, 7
    %v549 = vsub.s32 0, %v548
    %v550 = vrot.slane %v135, %v549
    %v552 = vadd.f32 %v530, %v550
    %v553 = vadd.f32 %v531, %v550
    %v554 = vadd.f32 %v532, %v550
    %v555 = vadd.f32 %v533, %v550
    %v556 = vadd.f32 %v534, %v550
    %v557 = vadd.f32 %v535, %v550
    %v558 = vadd.f32 %v536, %v550
    %v559 = vadd.f32 %v537, %v550
    %v560 = vadd.f32 %v538, %v550
    %v561 = vadd.f32 %v539, %v550
    %v562 = vadd.f32 %v540, %v550
    %v563 = vadd.f32 %v541, %v550
    %v564 = vadd.f32 %v542, %v550
    %v565 = vadd.f32 %v543, %v550
    %v566 = vadd.f32 %v544, %v550
    %v567 = vadd.f32 %v545, %v550
    %v568 = vmax.f32 %v552, 0.0
    %v569 = vmax.f32 %v553, 0.0
    %v570 = vmax.f32 %v554, 0.0
    %v571 = vmax.f32 %v555, 0.0
    %v572 = vmax.f32 %v556, 0.0
    %v573 = vmax.f32 %v557, 0.0
    %v574 = vmax.f32 %v558, 0.0
    %v575 = vmax.f32 %v559, 0.0
    %v576 = vmax.f32 %v560, 0.0
    %v577 = vmax.f32 %v561, 0.0
    %v578 = vmax.f32 %v562, 0.0
    %v579 = vmax.f32 %v563, 0.0
    %v580 = vmax.f32 %v564, 0.0
    %v581 = vmax.f32 %v565, 0.0
    %v582 = vmax.f32 %v566, 0.0
    %v583 = vmax.f32 %v567, 0.0
    %v584 = vpack.c.bf16 %v569, %v568
    %v585 = vpack.c.bf16 %v571, %v570
    %v586 = vpack.c.bf16 %v573, %v572
    %v587 = vpack.c.bf16 %v575, %v574
    %v588 = vpack.c.bf16 %v577, %v576
    %v589 = vpack.c.bf16 %v579, %v578
    %v590 = vpack.c.bf16 %v581, %v580
    %v591 = vpack.c.bf16 %v583, %v582
    %v592 = vld [vmem:[#allocation5] sm:$0xf]
    %v593 = vld [vmem:[#allocation5 + $0x4] sm:$0xf]
    %v594 = vld [vmem:[#allocation5 + $0x8] sm:$0xf]
    %v595 = vld [vmem:[#allocation5 + $0xc] sm:$0xf]
    %v596 = vld [vmem:[#allocation5 + $0x10] sm:$0xf]
    %v597 = vld [vmem:[#allocation5 + $0x14] sm:$0xf]
    %v598 = vld [vmem:[#allocation5 + $0x18] sm:$0xf]
    %v599 = vld [vmem:[#allocation5 + $0x1c] sm:$0xf]
    %v600 = vld [vmem:[#allocation5 + $0x20] sm:$0xf]
    %v601 = vld [vmem:[#allocation5 + $0x24] sm:$0xf]
    %v602 = vld [vmem:[#allocation5 + $0x28] sm:$0xf]
    %v603 = vld [vmem:[#allocation5 + $0x2c] sm:$0xf]
    %v604 = vld [vmem:[#allocation5 + $0x30] sm:$0xf]
    %v605 = vld [vmem:[#allocation5 + $0x34] sm:$0xf]
    %v606 = vld [vmem:[#allocation5 + $0x38] sm:$0xf]
    %v607 = vld [vmem:[#allocation5 + $0x3c] sm:$0xf]
    %v608 = vld [vmem:[%s6] sm:$0x1]
    %v625 = vunpack.c.l.b16 %v592
    %v626 = vunpack.c.l.b16 %v593
    %v627 = vunpack.c.l.b16 %v594
    %v628 = vunpack.c.l.b16 %v595
    %v629 = vunpack.c.l.b16 %v596
    %v630 = vunpack.c.l.b16 %v597
    %v631 = vunpack.c.l.b16 %v598
    %v632 = vunpack.c.l.b16 %v599
    %v633 = vunpack.c.l.b16 %v600
    %v634 = vunpack.c.l.b16 %v601
    %v635 = vunpack.c.l.b16 %v602
    %v636 = vunpack.c.l.b16 %v603
    %v637 = vunpack.c.l.b16 %v604
    %v638 = vunpack.c.l.b16 %v605
    %v639 = vunpack.c.l.b16 %v606
    %v640 = vunpack.c.l.b16 %v607
    %v641 = vpack.c.b16 %v626, %v625
    %v642 = vpack.c.b16 %v628, %v627
    %v643 = vpack.c.b16 %v630, %v629
    %v644 = vpack.c.b16 %v632, %v631
    %v645 = vpack.c.b16 %v634, %v633
    %v646 = vpack.c.b16 %v636, %v635
    %v647 = vpack.c.b16 %v638, %v637
    %v648 = vpack.c.b16 %v640, %v639
    %657 = vmatprep.subr.bf16.mxu0 0
    %658 = vmatpush1.bf16.msra.mxu0 %v641
    %659 = vmatprep.subr.bf16.mxu0 0
    %660 = vmatpush1.bf16.msra.mxu0 %v642
    %661 = vmatprep.subr.bf16.mxu0 0
    %662 = vmatpush1.bf16.msra.mxu0 %v643
    %663 = vmatprep.subr.bf16.mxu0 0
    %664 = vmatpush1.bf16.msra.mxu0 %v644
    %665 = vmatprep.subr.bf16.mxu0 0
    %666 = vmatpush1.bf16.msra.mxu0 %v645
    %667 = vmatprep.subr.bf16.mxu0 0
    %668 = vmatpush1.bf16.msra.mxu0 %v646
    %669 = vmatprep.subr.bf16.mxu0 0
    %670 = vmatpush1.bf16.msra.mxu0 %v647
    %671 = vmatprep.subr.bf16.mxu0 0
    %672 = vmatpush1.bf16.msra.mxu0 %v648
    %673 = vmatprep.subr.bf16.mxu0 0
    %674 = vmatpush1.bf16.msra.mxu0 0
    %675 = vmatprep.subr.bf16.mxu0 0
    %676 = vmatpush1.bf16.msra.mxu0 0
    %677 = vmatprep.subr.bf16.mxu0 0
    %678 = vmatpush1.bf16.msra.mxu0 0
    %679 = vmatprep.subr.bf16.mxu0 0
    %680 = vmatpush1.bf16.msra.mxu0 0
    %681 = vmatprep.subr.bf16.mxu0 0
    %682 = vmatpush1.bf16.msra.mxu0 0
    %683 = vmatprep.subr.bf16.mxu0 0
    %684 = vmatpush1.bf16.msra.mxu0 0
    %685 = vmatprep.subr.bf16.mxu0 0
    %686 = vmatpush1.bf16.msra.mxu0 0
    %687 = vmatprep.subr.bf16.mxu0 0
    %688 = vmatpush1.bf16.msra.mxu0 0
    %689 = vmatprep.mubr.bf16.mxu0 0
    %690 = vmatmul.mubr.bf16.gmra.mrb[0].mxu0 %v584
    %v691 = vpop.f32.mrb[0].mxu0
    %v692 = vadd.f32 0.0, %v691
    %v693 = vpop.f32.mrb[0].mxu0
    %v694 = vpop.f32.mrb[0].mxu0
    %v695 = vadd.f32 0.0, %v694
    %v696 = vpop.f32.mrb[0].mxu0
    %697 = vmatprep.mubr.bf16.mxu0 0
    %698 = vmatmul.mubr.bf16.gmra.mrb[0].mxu0 %v585
    %v699 = vpop.f32.mrb[0].mxu0
    %v700 = vadd.f32 0.0, %v699
    %v701 = vpop.f32.mrb[0].mxu0
    %v702 = vpop.f32.mrb[0].mxu0
    %v703 = vadd.f32 0.0, %v702
    %v704 = vpop.f32.mrb[0].mxu0
    %705 = vmatprep.mubr.bf16.mxu0 0
    %706 = vmatmul.mubr.bf16.gmra.mrb[0].mxu0 %v586
    %v707 = vpop.f32.mrb[0].mxu0
    %v708 = vadd.f32 0.0, %v707
    %v709 = vpop.f32.mrb[0].mxu0
    %v710 = vpop.f32.mrb[0].mxu0
    %v711 = vadd.f32 0.0, %v710
    %v712 = vpop.f32.mrb[0].mxu0
    %713 = vmatprep.mubr.bf16.mxu0 0
    %714 = vmatmul.mubr.bf16.gmra.mrb[0].mxu0 %v587
    %v715 = vpop.f32.mrb[0].mxu0
    %v716 = vadd.f32 0.0, %v715
    %v717 = vpop.f32.mrb[0].mxu0
    %v718 = vpop.f32.mrb[0].mxu0
    %v719 = vadd.f32 0.0, %v718
    %v720 = vpop.f32.mrb[0].mxu0
    %721 = vmatprep.mubr.bf16.mxu0 0
    %722 = vmatmul.mubr.bf16.gmra.mrb[0].mxu0 %v588
    %v723 = vpop.f32.mrb[0].mxu0
    %v724 = vadd.f32 0.0, %v723
    %v725 = vpop.f32.mrb[0].mxu0
    %v726 = vpop.f32.mrb[0].mxu0
    %v727 = vadd.f32 0.0, %v726
    %v728 = vpop.f32.mrb[0].mxu0
    %729 = vmatprep.mubr.bf16.mxu0 0
    %730 = vmatmul.mubr.bf16.gmra.mrb[0].mxu0 %v589
    %v731 = vpop.f32.mrb[0].mxu0
    %v732 = vadd.f32 0.0, %v731
    %v733 = vpop.f32.mrb[0].mxu0
    %v734 = vpop.f32.mrb[0].mxu0
    %v735 = vadd.f32 0.0, %v734
    %v736 = vpop.f32.mrb[0].mxu0
    %737 = vmatprep.mubr.bf16.mxu0 0
    %738 = vmatmul.mubr.bf16.gmra.mrb[0].mxu0 %v590
    %v739 = vpop.f32.mrb[0].mxu0
    %v740 = vadd.f32 0.0, %v739
    %v741 = vpop.f32.mrb[0].mxu0
    %v742 = vpop.f32.mrb[0].mxu0
    %v743 = vadd.f32 0.0, %v742
    %v744 = vpop.f32.mrb[0].mxu0
    %745 = vmatprep.mubr.bf16.mxu0 0
    %746 = vmatmul.mubr.bf16.gmra.mrb[0].mxu0 %v591
    %v747 = vpop.f32.mrb[0].mxu0
    %v748 = vadd.f32 0.0, %v747
    %v749 = vpop.f32.mrb[0].mxu0
    %v750 = vpop.f32.mrb[0].mxu0
    %v751 = vadd.f32 0.0, %v750
    %v752 = vpop.f32.mrb[0].mxu0
    %753 = vdwg.mxu0
    %v754 = vmul.f32 %v692, %v332
    %v755 = vmul.f32 %v695, %v337
    %v756 = vmul.f32 %v700, %v342
    %v757 = vmul.f32 %v703, %v347
    %v758 = vmul.f32 %v708, %v352
    %v759 = vmul.f32 %v711, %v357
    %v760 = vmul.f32 %v716, %v362
    %v761 = vmul.f32 %v719, %v367
    %v762 = vmul.f32 %v724, %v372
    %v763 = vmul.f32 %v727, %v377
    %v764 = vmul.f32 %v732, %v382
    %v765 = vmul.f32 %v735, %v387
    %v766 = vmul.f32 %v740, %v392
    %v767 = vmul.f32 %v743, %v397
    %v768 = vmul.f32 %v748, %v402
    %v769 = vmul.f32 %v751, %v407
    %v770 = vpack.c.bf16 %v755, %v754
    %v771 = vpack.c.bf16 %v757, %v756
    %v772 = vpack.c.bf16 %v759, %v758
    %v773 = vpack.c.bf16 %v761, %v760
    %v774 = vpack.c.bf16 %v763, %v762
    %v775 = vpack.c.bf16 %v765, %v764
    %v776 = vpack.c.bf16 %v767, %v766
    %v777 = vpack.c.bf16 %v769, %v768
    %778 = vmatprep.subr.bf16.mxu0 0
    %779 = vmatpush1.bf16.msra.mxu0 %v770
    %780 = vmatprep.subr.bf16.mxu0 0
    %781 = vmatpush1.bf16.msra.mxu0 %v771
    %782 = vmatprep.subr.bf16.mxu0 0
    %783 = vmatpush1.bf16.msra.mxu0 %v772
    %784 = vmatprep.subr.bf16.mxu0 0
    %785 = vmatpush1.bf16.msra.mxu0 %v773
    %786 = vmatprep.subr.bf16.mxu0 0
    %787 = vmatpush1.bf16.msra.mxu0 %v774
    %788 = vmatprep.subr.bf16.mxu0 0
    %789 = vmatpush1.bf16.msra.mxu0 %v775
    %790 = vmatprep.subr.bf16.mxu0 0
    %791 = vmatpush1.bf16.msra.mxu0 %v776
    %792 = vmatprep.subr.bf16.mxu0 0
    %793 = vmatpush1.bf16.msra.mxu0 %v777
    %794 = vmatprep.subr.bf16.mxu0 0
    %795 = vmatpush1.bf16.msra.mxu0 0
    %796 = vmatprep.subr.bf16.mxu0 0
    %797 = vmatpush1.bf16.msra.mxu0 0
    %798 = vmatprep.subr.bf16.mxu0 0
    %799 = vmatpush1.bf16.msra.mxu0 0
    %800 = vmatprep.subr.bf16.mxu0 0
    %801 = vmatpush1.bf16.msra.mxu0 0
    %802 = vmatprep.subr.bf16.mxu0 0
    %803 = vmatpush1.bf16.msra.mxu0 0
    %804 = vmatprep.subr.bf16.mxu0 0
    %805 = vmatpush1.bf16.msra.mxu0 0
    %806 = vmatprep.subr.bf16.mxu0 0
    %807 = vmatpush1.bf16.msra.mxu0 0
    %808 = vmatprep.subr.bf16.mxu0 0
    %809 = vmatpush1.bf16.msra.mxu0 0
    %810 = vmatprep.mubr.bf16.mxu0 0
    %811 = vmatmul.mubr.bf16.gmra.mrb[0].mxu0 %v79
    %v812 = vpop.f32.mrb[0].mxu0
    %v813 = vadd.f32 0.0, %v812
    %v814 = vpop.f32.mrb[0].mxu0
    %v815 = vpop.f32.mrb[0].mxu0
    %v816 = vadd.f32 0.0, %v815
    %v817 = vpop.f32.mrb[0].mxu0
    %818 = vmatprep.mubr.bf16.mxu0 0
    %819 = vmatmul.mubr.bf16.gmra.mrb[0].mxu0 %v80
    %v820 = vpop.f32.mrb[0].mxu0
    %v821 = vadd.f32 0.0, %v820
    %v822 = vpop.f32.mrb[0].mxu0
    %v823 = vpop.f32.mrb[0].mxu0
    %v824 = vadd.f32 0.0, %v823
    %v825 = vpop.f32.mrb[0].mxu0
    %826 = vmatprep.mubr.bf16.mxu0 0
    %827 = vmatmul.mubr.bf16.gmra.mrb[0].mxu0 %v81
    %v828 = vpop.f32.mrb[0].mxu0
    %v829 = vadd.f32 0.0, %v828
    %v830 = vpop.f32.mrb[0].mxu0
    %v831 = vpop.f32.mrb[0].mxu0
    %v832 = vadd.f32 0.0, %v831
    %v833 = vpop.f32.mrb[0].mxu0
    %834 = vmatprep.mubr.bf16.mxu0 0
    %835 = vmatmul.mubr.bf16.gmra.mrb[0].mxu0 %v82
    %v836 = vpop.f32.mrb[0].mxu0
    %v837 = vadd.f32 0.0, %v836
    %v838 = vpop.f32.mrb[0].mxu0
    %v839 = vpop.f32.mrb[0].mxu0
    %v840 = vadd.f32 0.0, %v839
    %v841 = vpop.f32.mrb[0].mxu0
    %842 = vmatprep.mubr.bf16.mxu0 0
    %843 = vmatmul.mubr.bf16.gmra.mrb[0].mxu0 %v83
    %v844 = vpop.f32.mrb[0].mxu0
    %v845 = vadd.f32 0.0, %v844
    %v846 = vpop.f32.mrb[0].mxu0
    %v847 = vpop.f32.mrb[0].mxu0
    %v848 = vadd.f32 0.0, %v847
    %v849 = vpop.f32.mrb[0].mxu0
    %850 = vmatprep.mubr.bf16.mxu0 0
    %851 = vmatmul.mubr.bf16.gmra.mrb[0].mxu0 %v84
    %v852 = vpop.f32.mrb[0].mxu0
    %v853 = vadd.f32 0.0, %v852
    %v854 = vpop.f32.mrb[0].mxu0
    %v855 = vpop.f32.mrb[0].mxu0
    %v856 = vadd.f32 0.0, %v855
    %v857 = vpop.f32.mrb[0].mxu0
    %858 = vmatprep.mubr.bf16.mxu0 0
    %859 = vmatmul.mubr.bf16.gmra.mrb[0].mxu0 %v85
    %v860 = vpop.f32.mrb[0].mxu0
    %v861 = vadd.f32 0.0, %v860
    %v862 = vpop.f32.mrb[0].mxu0
    %v863 = vpop.f32.mrb[0].mxu0
    %v864 = vadd.f32 0.0, %v863
    %v865 = vpop.f32.mrb[0].mxu0
    %866 = vmatprep.mubr.bf16.mxu0 0
    %867 = vmatmul.mubr.bf16.gmra.mrb[0].mxu0 %v86
    %v868 = vpop.f32.mrb[0].mxu0
    %v869 = vadd.f32 0.0, %v868
    %v870 = vpop.f32.mrb[0].mxu0
    %v871 = vpop.f32.mrb[0].mxu0
    %v872 = vadd.f32 0.0, %v871
    %v873 = vpop.f32.mrb[0].mxu0
    %874 = vdwg.mxu0
    %v875 = vmul.f32 %v813, %v332
    %v876 = vmul.f32 %v816, %v337
    %v877 = vmul.f32 %v821, %v342
    %v878 = vmul.f32 %v824, %v347
    %v879 = vmul.f32 %v829, %v352
    %v880 = vmul.f32 %v832, %v357
    %v881 = vmul.f32 %v837, %v362
    %v882 = vmul.f32 %v840, %v367
    %v883 = vmul.f32 %v845, %v372
    %v884 = vmul.f32 %v848, %v377
    %v885 = vmul.f32 %v853, %v382
    %v886 = vmul.f32 %v856, %v387
    %v887 = vmul.f32 %v861, %v392
    %v888 = vmul.f32 %v864, %v397
    %v889 = vmul.f32 %v869, %v402
    %v890 = vmul.f32 %v872, %v407
    %v892 = vlaneseq
    %v893 = vshrl.u32 %v892, 7
    %v894 = vsub.s32 0, %v893
    %v895 = vrot.slane %v608, %v894
    %v897 = vadd.f32 %v875, %v895
    %v898 = vadd.f32 %v876, %v895
    %v899 = vadd.f32 %v877, %v895
    %v900 = vadd.f32 %v878, %v895
    %v901 = vadd.f32 %v879, %v895
    %v902 = vadd.f32 %v880, %v895
    %v903 = vadd.f32 %v881, %v895
    %v904 = vadd.f32 %v882, %v895
    %v905 = vadd.f32 %v883, %v895
    %v906 = vadd.f32 %v884, %v895
    %v907 = vadd.f32 %v885, %v895
    %v908 = vadd.f32 %v886, %v895
    %v909 = vadd.f32 %v887, %v895
    %v910 = vadd.f32 %v888, %v895
    %v911 = vadd.f32 %v889, %v895
    %v912 = vadd.f32 %v890, %v895
    %v913 = vmax.f32 %v897, 0.0
    %v914 = vmax.f32 %v898, 0.0
    %v915 = vmax.f32 %v899, 0.0
    %v916 = vmax.f32 %v900, 0.0
    %v917 = vmax.f32 %v901, 0.0
    %v918 = vmax.f32 %v902, 0.0
    %v919 = vmax.f32 %v903, 0.0
    %v920 = vmax.f32 %v904, 0.0
    %v921 = vmax.f32 %v905, 0.0
    %v922 = vmax.f32 %v906, 0.0
    %v923 = vmax.f32 %v907, 0.0
    %v924 = vmax.f32 %v908, 0.0
    %v925 = vmax.f32 %v909, 0.0
    %v926 = vmax.f32 %v910, 0.0
    %v927 = vmax.f32 %v911, 0.0
    %v928 = vmax.f32 %v912, 0.0
    %v929 = vpack.c.bf16 %v914, %v913
    %v930 = vpack.c.bf16 %v916, %v915
    %v931 = vpack.c.bf16 %v918, %v917
    %v932 = vpack.c.bf16 %v920, %v919
    %v933 = vpack.c.bf16 %v922, %v921
    %v934 = vpack.c.bf16 %v924, %v923
    %v935 = vpack.c.bf16 %v926, %v925
    %v936 = vpack.c.bf16 %v928, %v927
    %v937 = vld [vmem:[#allocation7] sm:$0xf]
    %v938 = vld [vmem:[#allocation7 + $0x4] sm:$0xf]
    %v939 = vld [vmem:[#allocation7 + $0x8] sm:$0xf]
    %v940 = vld [vmem:[#allocation7 + $0xc] sm:$0xf]
    %v941 = vld [vmem:[#allocation7 + $0x10] sm:$0xf]
    %v942 = vld [vmem:[#allocation7 + $0x14] sm:$0xf]
    %v943 = vld [vmem:[#allocation7 + $0x18] sm:$0xf]
    %v944 = vld [vmem:[#allocation7 + $0x1c] sm:$0xf]
    %v945 = vld [vmem:[#allocation7 + $0x20] sm:$0xf]
    %v946 = vld [vmem:[#allocation7 + $0x24] sm:$0xf]
    %v947 = vld [vmem:[#allocation7 + $0x28] sm:$0xf]
    %v948 = vld [vmem:[#allocation7 + $0x2c] sm:$0xf]
    %v949 = vld [vmem:[#allocation7 + $0x30] sm:$0xf]
    %v950 = vld [vmem:[#allocation7 + $0x34] sm:$0xf]
    %v951 = vld [vmem:[#allocation7 + $0x38] sm:$0xf]
    %v952 = vld [vmem:[#allocation7 + $0x3c] sm:$0xf]
    %v953 = vld [vmem:[%s8] sm:$0x1]
    %v970 = vunpack.c.l.b16 %v937
    %v971 = vunpack.c.l.b16 %v938
    %v972 = vunpack.c.l.b16 %v939
    %v973 = vunpack.c.l.b16 %v940
    %v974 = vunpack.c.l.b16 %v941
    %v975 = vunpack.c.l.b16 %v942
    %v976 = vunpack.c.l.b16 %v943
    %v977 = vunpack.c.l.b16 %v944
    %v978 = vunpack.c.l.b16 %v945
    %v979 = vunpack.c.l.b16 %v946
    %v980 = vunpack.c.l.b16 %v947
    %v981 = vunpack.c.l.b16 %v948
    %v982 = vunpack.c.l.b16 %v949
    %v983 = vunpack.c.l.b16 %v950
    %v984 = vunpack.c.l.b16 %v951
    %v985 = vunpack.c.l.b16 %v952
    %v986 = vpack.c.b16 %v971, %v970
    %v987 = vpack.c.b16 %v973, %v972
    %v988 = vpack.c.b16 %v975, %v974
    %v989 = vpack.c.b16 %v977, %v976
    %v990 = vpack.c.b16 %v979, %v978
    %v991 = vpack.c.b16 %v981, %v980
    %v992 = vpack.c.b16 %v983, %v982
    %v993 = vpack.c.b16 %v985, %v984
    %1002 = vmatprep.subr.bf16.mxu0 0
    %1003 = vmatpush1.bf16.msra.mxu0 %v986
    %1004 = vmatprep.subr.bf16.mxu0 0
    %1005 = vmatpush1.bf16.msra.mxu0 %v987
    %1006 = vmatprep.subr.bf16.mxu0 0
    %1007 = vmatpush1.bf16.msra.mxu0 %v988
    %1008 = vmatprep.subr.bf16.mxu0 0
    %1009 = vmatpush1.bf16.msra.mxu0 %v989
    %1010 = vmatprep.subr.bf16.mxu0 0
    %1011 = vmatpush1.bf16.msra.mxu0 %v990
    %1012 = vmatprep.subr.bf16.mxu0 0
    %1013 = vmatpush1.bf16.msra.mxu0 %v991
    %1014 = vmatprep.subr.bf16.mxu0 0
    %1015 = vmatpush1.bf16.msra.mxu0 %v992
    %1016 = vmatprep.subr.bf16.mxu0 0
    %1017 = vmatpush1.bf16.msra.mxu0 %v993
    %1018 = vmatprep.subr.bf16.mxu0 0
    %1019 = vmatpush1.bf16.msra.mxu0 0
    %1020 = vmatprep.subr.bf16.mxu0 0
    %1021 = vmatpush1.bf16.msra.mxu0 0
    %1022 = vmatprep.subr.bf16.mxu0 0
    %1023 = vmatpush1.bf16.msra.mxu0 0
    %1024 = vmatprep.subr.bf16.mxu0 0
    %1025 = vmatpush1.bf16.msra.mxu0 0
    %1026 = vmatprep.subr.bf16.mxu0 0
    %1027 = vmatpush1.bf16.msra.mxu0 0
    %1028 = vmatprep.subr.bf16.mxu0 0
    %1029 = vmatpush1.bf16.msra.mxu0 0
    %1030 = vmatprep.subr.bf16.mxu0 0
    %1031 = vmatpush1.bf16.msra.mxu0 0
    %1032 = vmatprep.subr.bf16.mxu0 0
    %1033 = vmatpush1.bf16.msra.mxu0 0
    %1034 = vmatprep.mubr.bf16.mxu0 0
    %1035 = vmatmul.mubr.bf16.gmra.mrb[0].mxu0 %v929
    %v1036 = vpop.f32.mrb[0].mxu0
    %v1037 = vadd.f32 0.0, %v1036
    %v1038 = vpop.f32.mrb[0].mxu0
    %v1039 = vpop.f32.mrb[0].mxu0
    %v1040 = vadd.f32 0.0, %v1039
    %v1041 = vpop.f32.mrb[0].mxu0
    %1042 = vmatprep.mubr.bf16.mxu0 0
    %1043 = vmatmul.mubr.bf16.gmra.mrb[0].mxu0 %v930
    %v1044 = vpop.f32.mrb[0].mxu0
    %v1045 = vadd.f32 0.0, %v1044
    %v1046 = vpop.f32.mrb[0].mxu0
    %v1047 = vpop.f32.mrb[0].mxu0
    %v1048 = vadd.f32 0.0, %v1047
    %v1049 = vpop.f32.mrb[0].mxu0
    %1050 = vmatprep.mubr.bf16.mxu0 0
    %1051 = vmatmul.mubr.bf16.gmra.mrb[0].mxu0 %v931
    %v1052 = vpop.f32.mrb[0].mxu0
    %v1053 = vadd.f32 0.0, %v1052
    %v1054 = vpop.f32.mrb[0].mxu0
    %v1055 = vpop.f32.mrb[0].mxu0
    %v1056 = vadd.f32 0.0, %v1055
    %v1057 = vpop.f32.mrb[0].mxu0
    %1058 = vmatprep.mubr.bf16.mxu0 0
    %1059 = vmatmul.mubr.bf16.gmra.mrb[0].mxu0 %v932
    %v1060 = vpop.f32.mrb[0].mxu0
    %v1061 = vadd.f32 0.0, %v1060
    %v1062 = vpop.f32.mrb[0].mxu0
    %v1063 = vpop.f32.mrb[0].mxu0
    %v1064 = vadd.f32 0.0, %v1063
    %v1065 = vpop.f32.mrb[0].mxu0
    %1066 = vmatprep.mubr.bf16.mxu0 0
    %1067 = vmatmul.mubr.bf16.gmra.mrb[0].mxu0 %v933
    %v1068 = vpop.f32.mrb[0].mxu0
    %v1069 = vadd.f32 0.0, %v1068
    %v1070 = vpop.f32.mrb[0].mxu0
    %v1071 = vpop.f32.mrb[0].mxu0
    %v1072 = vadd.f32 0.0, %v1071
    %v1073 = vpop.f32.mrb[0].mxu0
    %1074 = vmatprep.mubr.bf16.mxu0 0
    %1075 = vmatmul.mubr.bf16.gmra.mrb[0].mxu0 %v934
    %v1076 = vpop.f32.mrb[0].mxu0
    %v1077 = vadd.f32 0.0, %v1076
    %v1078 = vpop.f32.mrb[0].mxu0
    %v1079 = vpop.f32.mrb[0].mxu0
    %v1080 = vadd.f32 0.0, %v1079
    %v1081 = vpop.f32.mrb[0].mxu0
    %1082 = vmatprep.mubr.bf16.mxu0 0
    %1083 = vmatmul.mubr.bf16.gmra.mrb[0].mxu0 %v935
    %v1084 = vpop.f32.mrb[0].mxu0
    %v1085 = vadd.f32 0.0, %v1084
    %v1086 = vpop.f32.mrb[0].mxu0
    %v1087 = vpop.f32.mrb[0].mxu0
    %v1088 = vadd.f32 0.0, %v1087
    %v1089 = vpop.f32.mrb[0].mxu0
    %1090 = vmatprep.mubr.bf16.mxu0 0
    %1091 = vmatmul.mubr.bf16.gmra.mrb[0].mxu0 %v936
    %v1092 = vpop.f32.mrb[0].mxu0
    %v1093 = vadd.f32 0.0, %v1092
    %v1094 = vpop.f32.mrb[0].mxu0
    %v1095 = vpop.f32.mrb[0].mxu0
    %v1096 = vadd.f32 0.0, %v1095
    %v1097 = vpop.f32.mrb[0].mxu0
    %1098 = vdwg.mxu0
    %v1099 = vmul.f32 %v1037, %v332
    %v1100 = vmul.f32 %v1040, %v337
    %v1101 = vmul.f32 %v1045, %v342
    %v1102 = vmul.f32 %v1048, %v347
    %v1103 = vmul.f32 %v1053, %v352
    %v1104 = vmul.f32 %v1056, %v357
    %v1105 = vmul.f32 %v1061, %v362
    %v1106 = vmul.f32 %v1064, %v367
    %v1107 = vmul.f32 %v1069, %v372
    %v1108 = vmul.f32 %v1072, %v377
    %v1109 = vmul.f32 %v1077, %v382
    %v1110 = vmul.f32 %v1080, %v387
    %v1111 = vmul.f32 %v1085, %v392
    %v1112 = vmul.f32 %v1088, %v397
    %v1113 = vmul.f32 %v1093, %v402
    %v1114 = vmul.f32 %v1096, %v407
    %v1115 = vpack.c.bf16 %v1100, %v1099
    %v1116 = vpack.c.bf16 %v1102, %v1101
    %v1117 = vpack.c.bf16 %v1104, %v1103
    %v1118 = vpack.c.bf16 %v1106, %v1105
    %v1119 = vpack.c.bf16 %v1108, %v1107
    %v1120 = vpack.c.bf16 %v1110, %v1109
    %v1121 = vpack.c.bf16 %v1112, %v1111
    %v1122 = vpack.c.bf16 %v1114, %v1113
    %1123 = vmatprep.subr.bf16.mxu0 0
    %1124 = vmatpush1.bf16.msra.mxu0 %v1115
    %1125 = vmatprep.subr.bf16.mxu0 0
    %1126 = vmatpush1.bf16.msra.mxu0 %v1116
    %1127 = vmatprep.subr.bf16.mxu0 0
    %1128 = vmatpush1.bf16.msra.mxu0 %v1117
    %1129 = vmatprep.subr.bf16.mxu0 0
    %1130 = vmatpush1.bf16.msra.mxu0 %v1118
    %1131 = vmatprep.subr.bf16.mxu0 0
    %1132 = vmatpush1.bf16.msra.mxu0 %v1119
    %1133 = vmatprep.subr.bf16.mxu0 0
    %1134 = vmatpush1.bf16.msra.mxu0 %v1120
    %1135 = vmatprep.subr.bf16.mxu0 0
    %1136 = vmatpush1.bf16.msra.mxu0 %v1121
    %1137 = vmatprep.subr.bf16.mxu0 0
    %1138 = vmatpush1.bf16.msra.mxu0 %v1122
    %1139 = vmatprep.subr.bf16.mxu0 0
    %1140 = vmatpush1.bf16.msra.mxu0 0
    %1141 = vmatprep.subr.bf16.mxu0 0
    %1142 = vmatpush1.bf16.msra.mxu0 0
    %1143 = vmatprep.subr.bf16.mxu0 0
    %1144 = vmatpush1.bf16.msra.mxu0 0
    %1145 = vmatprep.subr.bf16.mxu0 0
    %1146 = vmatpush1.bf16.msra.mxu0 0
    %1147 = vmatprep.subr.bf16.mxu0 0
    %1148 = vmatpush1.bf16.msra.mxu0 0
    %1149 = vmatprep.subr.bf16.mxu0 0
    %1150 = vmatpush1.bf16.msra.mxu0 0
    %1151 = vmatprep.subr.bf16.mxu0 0
    %1152 = vmatpush1.bf16.msra.mxu0 0
    %1153 = vmatprep.subr.bf16.mxu0 0
    %1154 = vmatpush1.bf16.msra.mxu0 0
    %1155 = vmatprep.mubr.bf16.mxu0 0
    %1156 = vmatmul.mubr.bf16.gmra.mrb[0].mxu0 %v79
    %v1157 = vpop.f32.mrb[0].mxu0
    %v1158 = vadd.f32 0.0, %v1157
    %v1159 = vpop.f32.mrb[0].mxu0
    %v1160 = vpop.f32.mrb[0].mxu0
    %v1161 = vadd.f32 0.0, %v1160
    %v1162 = vpop.f32.mrb[0].mxu0
    %1163 = vmatprep.mubr.bf16.mxu0 0
    %1164 = vmatmul.mubr.bf16.gmra.mrb[0].mxu0 %v80
    %v1165 = vpop.f32.mrb[0].mxu0
    %v1166 = vadd.f32 0.0, %v1165
    %v1167 = vpop.f32.mrb[0].mxu0
    %v1168 = vpop.f32.mrb[0].mxu0
    %v1169 = vadd.f32 0.0, %v1168
    %v1170 = vpop.f32.mrb[0].mxu0
    %1171 = vmatprep.mubr.bf16.mxu0 0
    %1172 = vmatmul.mubr.bf16.gmra.mrb[0].mxu0 %v81
    %v1173 = vpop.f32.mrb[0].mxu0
    %v1174 = vadd.f32 0.0, %v1173
    %v1175 = vpop.f32.mrb[0].mxu0
    %v1176 = vpop.f32.mrb[0].mxu0
    %v1177 = vadd.f32 0.0, %v1176
    %v1178 = vpop.f32.mrb[0].mxu0
    %1179 = vmatprep.mubr.bf16.mxu0 0
    %1180 = vmatmul.mubr.bf16.gmra.mrb[0].mxu0 %v82
    %v1181 = vpop.f32.mrb[0].mxu0
    %v1182 = vadd.f32 0.0, %v1181
    %v1183 = vpop.f32.mrb[0].mxu0
    %v1184 = vpop.f32.mrb[0].mxu0
    %v1185 = vadd.f32 0.0, %v1184
    %v1186 = vpop.f32.mrb[0].mxu0
    %1187 = vmatprep.mubr.bf16.mxu0 0
    %1188 = vmatmul.mubr.bf16.gmra.mrb[0].mxu0 %v83
    %v1189 = vpop.f32.mrb[0].mxu0
    %v1190 = vadd.f32 0.0, %v1189
    %v1191 = vpop.f32.mrb[0].mxu0
    %v1192 = vpop.f32.mrb[0].mxu0
    %v1193 = vadd.f32 0.0, %v1192
    %v1194 = vpop.f32.mrb[0].mxu0
    %1195 = vmatprep.mubr.bf16.mxu0 0
    %1196 = vmatmul.mubr.bf16.gmra.mrb[0].mxu0 %v84
    %v1197 = vpop.f32.mrb[0].mxu0
    %v1198 = vadd.f32 0.0, %v1197
    %v1199 = vpop.f32.mrb[0].mxu0
    %v1200 = vpop.f32.mrb[0].mxu0
    %v1201 = vadd.f32 0.0, %v1200
    %v1202 = vpop.f32.mrb[0].mxu0
    %1203 = vmatprep.mubr.bf16.mxu0 0
    %1204 = vmatmul.mubr.bf16.gmra.mrb[0].mxu0 %v85
    %v1205 = vpop.f32.mrb[0].mxu0
    %v1206 = vadd.f32 0.0, %v1205
    %v1207 = vpop.f32.mrb[0].mxu0
    %v1208 = vpop.f32.mrb[0].mxu0
    %v1209 = vadd.f32 0.0, %v1208
    %v1210 = vpop.f32.mrb[0].mxu0
    %1211 = vmatprep.mubr.bf16.mxu0 0
    %1212 = vmatmul.mubr.bf16.gmra.mrb[0].mxu0 %v86
    %v1213 = vpop.f32.mrb[0].mxu0
    %v1214 = vadd.f32 0.0, %v1213
    %v1215 = vpop.f32.mrb[0].mxu0
    %v1216 = vpop.f32.mrb[0].mxu0
    %v1217 = vadd.f32 0.0, %v1216
    %v1218 = vpop.f32.mrb[0].mxu0
    %1219 = vdwg.mxu0
    %v1220 = vmul.f32 %v1158, %v332
    %v1221 = vmul.f32 %v1161, %v337
    %v1222 = vmul.f32 %v1166, %v342
    %v1223 = vmul.f32 %v1169, %v347
    %v1224 = vmul.f32 %v1174, %v352
    %v1225 = vmul.f32 %v1177, %v357
    %v1226 = vmul.f32 %v1182, %v362
    %v1227 = vmul.f32 %v1185, %v367
    %v1228 = vmul.f32 %v1190, %v372
    %v1229 = vmul.f32 %v1193, %v377
    %v1230 = vmul.f32 %v1198, %v382
    %v1231 = vmul.f32 %v1201, %v387
    %v1232 = vmul.f32 %v1206, %v392
    %v1233 = vmul.f32 %v1209, %v397
    %v1234 = vmul.f32 %v1214, %v402
    %v1235 = vmul.f32 %v1217, %v407
    %v1237 = vlaneseq
    %v1238 = vshrl.u32 %v1237, 7
    %v1239 = vsub.s32 0, %v1238
    %v1240 = vrot.slane %v953, %v1239
    %v1242 = vadd.f32 %v1220, %v1240
    %v1243 = vadd.f32 %v1221, %v1240
    %v1244 = vadd.f32 %v1222, %v1240
    %v1245 = vadd.f32 %v1223, %v1240
    %v1246 = vadd.f32 %v1224, %v1240
    %v1247 = vadd.f32 %v1225, %v1240
    %v1248 = vadd.f32 %v1226, %v1240
    %v1249 = vadd.f32 %v1227, %v1240
    %v1250 = vadd.f32 %v1228, %v1240
    %v1251 = vadd.f32 %v1229, %v1240
    %v1252 = vadd.f32 %v1230, %v1240
    %v1253 = vadd.f32 %v1231, %v1240
    %v1254 = vadd.f32 %v1232, %v1240
    %v1255 = vadd.f32 %v1233, %v1240
    %v1256 = vadd.f32 %v1234, %v1240
    %v1257 = vadd.f32 %v1235, %v1240
    %1258 = vst [vmem:[#allocation8] sm:$0xff] %v1242
    %1259 = vst [vmem:[#allocation8 + $0x8] sm:$0xff] %v1243
    %1260 = vst [vmem:[#allocation8 + $0x10] sm:$0xff] %v1244
    %1261 = vst [vmem:[#allocation8 + $0x18] sm:$0xff] %v1245
    %1262 = vst [vmem:[#allocation8 + $0x20] sm:$0xff] %v1246
    %1263 = vst [vmem:[#allocation8 + $0x28] sm:$0xff] %v1247
    %1264 = vst [vmem:[#allocation8 + $0x30] sm:$0xff] %v1248
    %1265 = vst [vmem:[#allocation8 + $0x38] sm:$0xff] %v1249
    %1266 = vst [vmem:[#allocation8 + $0x40] sm:$0xff] %v1250
    %1267 = vst [vmem:[#allocation8 + $0x48] sm:$0xff] %v1251
    %1268 = vst [vmem:[#allocation8 + $0x50] sm:$0xff] %v1252
    %1269 = vst [vmem:[#allocation8 + $0x58] sm:$0xff] %v1253
    %1270 = vst [vmem:[#allocation8 + $0x60] sm:$0xff] %v1254
    %1271 = vst [vmem:[#allocation8 + $0x68] sm:$0xff] %v1255
    %1272 = vst [vmem:[#allocation8 + $0x70] sm:$0xff] %v1256
    %1273 = vst [vmem:[#allocation8 + $0x78] sm:$0xff] %v1257
    // Predicated region
    $region50: #{tpu_custom_call.1} parent=1 // pred_check
      _
    $region51: #{tpu_custom_call.1} parent=1 // pred_check_branch
      %1275 = sbr.rel (0) target = $region53
    $region52: #{tpu_custom_call.1} parent=1 // pred_region
      %s1277 = ssub.s32 2048, 2048
      %1278 = vsyncadd [#allocation4], %s1277
      %s1279 = sshll.u32 [#allocation8], 4
      %s1280 = int_to_ptr.vmem [resolvable:$true] %s1279
      %1285 = dma.vmem_to_hbm [thread:$0]  %s1280, 2048, %s9, [#allocation4], 128, 128, 8
    $region53: #{tpu_custom_call.1} parent=1 // pred_fallthru
      _
    // Predicated region
    $region54: #{tpu_custom_call.1} parent=1 // pred_check
      _
    $region55: #{tpu_custom_call.1} parent=1 // pred_check_branch
      %1287 = sbr.rel (0) target = $region57
    $region56: #{tpu_custom_call.1} parent=1 // pred_region
      %1288 = dma.done [#allocation4], 2048
    $region57: #{tpu_custom_call.1} parent=1 // pred_fallthru
      _
    %1289 = vsyncpa [#allocation3], 1
    %1290 = vsyncpa [#allocation6], 1
    %1291 = vsyncpa [#allocation4], 1

</llo_original>
